<compile_context>
chip_gen: v6e
topology: v6e:2x2x1
jax: 0.10.0
libtpu: 0.0.40
codegen_flags: <defaults>
</compile_context>

<pallas_src>
import functools

import jax
import jax.numpy as jnp
from jax.experimental import pallas as pl
from jax.experimental.pallas import tpu as pltpu


LANE = 128


def _round_up(n, m):
    return ((n + m - 1) // m) * m


# --------------------------------------------------------------------------- #
# Kernel
# --------------------------------------------------------------------------- #
def mfpnet1_kernel(x_ref, w1_ref, b1_ref, wl_ref, bl_ref, wc_ref, bc_ref,
                   rep_ref, logits_ref):
    # x_ref: (tile, E) bf16 tile of tokens.
    x = x_ref[...]

    # fused (transfer @ fnn): embed_dim -> Hp (128-lane padded), f32 accumulate.
    h = jnp.dot(x, w1_ref[...], preferred_element_type=jnp.float32) + b1_ref[...]
    rep = jnp.maximum(h, 0.0)                        # relu -> rep (padded cols stay 0)
    rep_bf = rep.astype(jnp.bfloat16)
    rep_ref[...] = rep_bf                            # lane-dense (tile, Hp) bf16 store

    # FlipGradientBuilder.apply is identity in forward.
    v = jnp.dot(rep_bf, wl_ref[...], preferred_element_type=jnp.float32) + bl_ref[...]
    v = jnp.maximum(v, 0.0)
    # Dropout(0.5) in eval mode == identity.

    # criterion ('ced_spec') classifier projection hidden_dim -> num_label.
    # Matmul stays lane-dense (Hp x Lp) in VMEM; only the real L columns are
    # written back to HBM (out block (tile, L)).
    logits = jnp.dot(v.astype(jnp.bfloat16), wc_ref[...],
                     preferred_element_type=jnp.float32) + bc_ref[...]
    L = logits_ref.shape[-1]
    logits_ref[...] = logits[:, :L].astype(jnp.bfloat16)


# --------------------------------------------------------------------------- #
# One-time parameter preparation (hoisted out of the per-call forward path)
# --------------------------------------------------------------------------- #
def prepare_mfpnet1_params(params):
    """Fuse transfer+fnn, zero-pad feature dims to 128 lanes, cast to bf16.

    Run ONCE per model; the returned dict is what the forward consumes.
    """
    emb = params["embedding"]                              # (V, E)
    wt, bt = params["transfer_w"], params["transfer_b"]    # (E, H), (1, H)
    wf, bf_ = params["fnn_w"], params["fnn_b"]             # (H, H), (1, H)
    wl, bl = params["linear_w"], params["linear_b"]        # (H, H), (1, H)
    wc, bc = params["cls_w"], params["cls_b"]              # (H, L), (1, L)

    E = emb.shape[1]
    H = wt.shape[1]
    L = wc.shape[1]
    Hp = _round_up(H, LANE)
    Lp = _round_up(L, LANE)

    # Fuse transfer + fnn (self.net is identity, no nonlinearity in between).
    w1 = wt @ wf                     # (E, H)
    b1 = bt @ wf + bf_               # (1, H)

    def pad2(a, rows, cols):
        out = jnp.zeros((rows, cols), a.dtype)
        return out.at[: a.shape[0], : a.shape[1]].set(a)

    # Zero-pad feature dims to 128 lanes (mathematically exact: relu(0)=0 and
    # zero rows/cols contribute nothing downstream). Weights bf16, biases f32.
    prepped = {
        "emb": emb.astype(jnp.bfloat16),                       # gather lands bf16
        "w1": pad2(w1, E, Hp).astype(jnp.bfloat16),
        "b1": pad2(b1, 1, Hp).astype(jnp.float32),
        "wl": pad2(wl, Hp, Hp).astype(jnp.bfloat16),
        "bl": pad2(bl, 1, Hp).astype(jnp.float32),
        "wc": pad2(wc, Hp, Lp).astype(jnp.bfloat16),
        "bc": pad2(bc, 1, Lp).astype(jnp.float32),
    }
    meta = {"E": E, "H": H, "L": L, "Hp": Hp, "Lp": Lp}
    return prepped, meta


# --------------------------------------------------------------------------- #
# Forward (hot path: gather + single pallas_call, padded flat outputs)
# --------------------------------------------------------------------------- #
@functools.partial(jax.jit, static_argnames=("L", "token_tile"))
def mfpnet1_forward_flat(source, prepped, *, L, token_tile=1024):
    """source: (B, S) int32 ids. Returns (logits (T_pad, L) bf16,
    rep (T_pad, Hp) bf16) in flat token-major padded layout (no epilogue)."""
    emb = prepped["emb"]
    w1, b1 = prepped["w1"], prepped["b1"]
    wl, bl = prepped["wl"], prepped["bl"]
    wc, bc = prepped["wc"], prepped["bc"]

    E, Hp = w1.shape
    Lp = wc.shape[1]
    B, S = source.shape
    T = B * S

    # Embedding gather (glue), directly in bf16.
    # TODO(synk): could be fused into the kernel via scalar-prefetched ids +
    # a VMEM-resident table; kept as XLA glue here for robustness.
    x = jnp.take(emb, source.reshape(-1), axis=0)          # (T, E) bf16

    # --- token tiling -------------------------------------------------------
    # Round the requested tile to a multiple of 16 (bf16 sublane pack), and cap
    # it at ~T/2 so the parallel grid axis has >= 2 steps (v7x has 2 TCs).
    tile = _round_up(max(16, int(token_tile)), 16)
    T16 = _round_up(T, 16)
    half = (T16 // 2) // 16 * 16
    tile = min(tile, half) if half >= 16 else T16
    T_pad = _round_up(T, tile)
    if T_pad != T:
        x = jnp.zeros((T_pad, E), x.dtype).at[:T].set(x)

    grid = (T_pad // tile,)
    full = lambda i: (0, 0)
    row_tile = lambda i: (i, 0)

    flops = 2 * T_pad * (E * Hp + Hp * Hp + Hp * Lp)
    bytes_accessed = (
        T_pad * E * 2                                    # x (bf16)
        + (w1.size + wl.size + wc.size) * 2              # weights (bf16)
        + (b1.size + bl.size + bc.size) * 4              # biases (f32)
        + T_pad * Hp * 2 + T_pad * L * 2                 # rep + logits (bf16)
    )

    # TODO(synk): if hidden_dim/num_label grow (H >~ 2K), add an 'arbitrary'
    # K-tiling grid dim over Hp with an f32 accumulator scratch and a
    # vmem_limit_bytes bump instead of keeping (Hp,Hp)/(Hp,Lp) fully resident
    # (v7x scoped VMEM is the first to overflow).
    rep_p, logits_p = pl.pallas_call(
        mfpnet1_kernel,
        out_shape=(
            jax.ShapeDtypeStruct((T_pad, Hp), jnp.bfloat16),
            jax.ShapeDtypeStruct((T_pad, L), jnp.bfloat16),
        ),
        grid_spec=pltpu.PrefetchScalarGridSpec(
            num_scalar_prefetch=0,
            grid=grid,
            in_specs=[
                pl.BlockSpec((tile, E), row_tile),   # x tile
                pl.BlockSpec((E, Hp), full),         # fused transfer+fnn W
                pl.BlockSpec((1, Hp), full),         # fused bias
                pl.BlockSpec((Hp, Hp), full),        # linear W
                pl.BlockSpec((1, Hp), full),         # linear b
                pl.BlockSpec((Hp, Lp), full),        # cls W (lane-dense in VMEM)
                pl.BlockSpec((1, Lp), full),         # cls b
            ],
            out_specs=[
                pl.BlockSpec((tile, Hp), row_tile),  # rep (lane-dense, bf16)
                pl.BlockSpec((tile, L), row_tile),   # logits (un-padded L cols)
            ],
        ),
        compiler_params=pltpu.CompilerParams(
            dimension_semantics=("parallel",),
        ),
        cost_estimate=pl.CostEstimate(
            flops=int(flops), transcendentals=0, bytes_accessed=int(bytes_accessed)),
    )(x, w1, b1, wl, bl, wc, bc)

    return logits_p, rep_p


def mfpnet1_forward(source, prepped, meta, *, token_tile=1024):
    """Convenience wrapper returning (logits (B,S,L), rep (B,S,H)).

    NOTE: the row/column slice + reshape below is an extra HBM pass over the
    outputs; perf-sensitive callers should consume mfpnet1_forward_flat's
    padded flat layout directly.
    """
    B, S = source.shape
    T = B * S
    H, L = meta["H"], meta["L"]
    logits_p, rep_p = mfpnet1_forward_flat(source, prepped, L=L, token_tile=token_tile)
    logits = logits_p[:T, :L].reshape(B, S, L)
    rep = rep_p[:T, :H].reshape(B, S, H)
    return logits, rep


# --------------------------------------------------------------------------- #
# Parameter construction (demo)
# --------------------------------------------------------------------------- #
def make_params(key, vocab, embed_dim, hidden_dim, num_label):
    ks = jax.random.split(key, 9)
    scale = 0.02
    return {
        "embedding": scale * jax.random.normal(ks[0], (vocab, embed_dim), jnp.float32),
        "transfer_w": scale * jax.random.normal(ks[1], (embed_dim, hidden_dim), jnp.float32),
        "transfer_b": scale * jax.random.normal(ks[2], (1, hidden_dim), jnp.float32),
        "fnn_w": scale * jax.random.normal(ks[3], (hidden_dim, hidden_dim), jnp.float32),
        "fnn_b": scale * jax.random.normal(ks[4], (1, hidden_dim), jnp.float32),
        "linear_w": scale * jax.random.normal(ks[5], (hidden_dim, hidden_dim), jnp.float32),
        "linear_b": scale * jax.random.normal(ks[6], (1, hidden_dim), jnp.float32),
        "cls_w": scale * jax.random.normal(ks[7], (hidden_dim, num_label), jnp.float32),
        "cls_b": scale * jax.random.normal(ks[8], (1, num_label), jnp.float32),
    }


if __name__ == "__main__":
    # Small shapes consistent with the module:
    B, S = 2, 8          # batch, sequence length
    VOCAB = 20
    EMBED_DIM = 16       # hp.embed_dim  (!= hidden_dim so `transfer` exists)
    HIDDEN_DIM = 32      # hp.hidden_dim
    NUM_LABEL = 4

    key = jax.random.PRNGKey(0)
    k_src, k_par = jax.random.split(key)

    source = jax.random.randint(k_src, (B, S), 0, VOCAB, dtype=jnp.int32)
    params = make_params(k_par, VOCAB, EMBED_DIM, HIDDEN_DIM, NUM_LABEL)

    prepped, meta = prepare_mfpnet1_params(params)        # one-time weight prep
    logits, rep = mfpnet1_forward(source, prepped, meta)
    jax.block_until_ready((logits, rep))

    # Sanity check against a plain-JAX f32 reference of the same forward math
    # (kernel uses bf16 operands/outputs + fused transfer/fnn -> modest tolerance).
    x = jnp.take(params["embedding"], source.reshape(-1), axis=0)
    h = x @ params["transfer_w"] + params["transfer_b"]
    h = h @ params["fnn_w"] + params["fnn_b"]
    rep_ref = jnp.maximum(h, 0.0)
    v = jnp.maximum(rep_ref @ params["linear_w"] + params["linear_b"], 0.0)
    logits_ref = v @ params["cls_w"] + params["cls_b"]

    rep_out = rep.astype(jnp.float32).reshape(-1, HIDDEN_DIM)
    logits_out = logits.astype(jnp.float32).reshape(-1, NUM_LABEL)
    assert jnp.allclose(rep_out, rep_ref, atol=2e-2, rtol=2e-2)
    assert jnp.allclose(logits_out, logits_ref, atol=2e-2, rtol=2e-2)

    print("KERNEL_OK")
</pallas_src>

<mosaic_0001>
module attributes {stable_mosaic.version = 11 : i64} {
  func.func @mfpnet1_kernel(%arg0: i32, %arg1: memref<16x16xbf16, #tpu.memory_space<vmem>>, %arg2: memref<16x128xbf16, #tpu.memory_space<vmem>>, %arg3: memref<1x128xf32, #tpu.memory_space<vmem>>, %arg4: memref<128x128xbf16, #tpu.memory_space<vmem>>, %arg5: memref<1x128xf32, #tpu.memory_space<vmem>>, %arg6: memref<128x128xbf16, #tpu.memory_space<vmem>>, %arg7: memref<1x128xf32, #tpu.memory_space<vmem>>, %arg8: memref<16x128xbf16, #tpu.memory_space<vmem>>, %arg9: memref<16x4xbf16, #tpu.memory_space<vmem>>) attributes {dimension_semantics = [#tpu.dimension_semantics<parallel>], iteration_bounds = array<i64: 1>, scalar_prefetch = 0 : i64, scratch_operands = 0 : i64, tpu.core_type = #tpu.core_type<tc>, window_params = [{transform_indices = @transform_0, window_bounds = array<i64: 16, 16>}, {pipeline_mode = #tpu.pipeline_mode<synchronous>, transform_indices = @transform_1, window_bounds = array<i64: 16, 128>}, {pipeline_mode = #tpu.pipeline_mode<synchronous>, transform_indices = @transform_2, window_bounds = array<i64: 1, 128>}, {pipeline_mode = #tpu.pipeline_mode<synchronous>, transform_indices = @transform_3, window_bounds = array<i64: 128, 128>}, {pipeline_mode = #tpu.pipeline_mode<synchronous>, transform_indices = @transform_4, window_bounds = array<i64: 1, 128>}, {pipeline_mode = #tpu.pipeline_mode<synchronous>, transform_indices = @transform_5, window_bounds = array<i64: 128, 128>}, {pipeline_mode = #tpu.pipeline_mode<synchronous>, transform_indices = @transform_6, window_bounds = array<i64: 1, 128>}, {transform_indices = @transform_7, window_bounds = array<i64: 16, 128>}, {transform_indices = @transform_8, window_bounds = array<i64: 16, 4>}]} {
    %c0 = arith.constant 0 : index
    %c0_0 = arith.constant 0 : index
    %0 = vector.load %arg1[%c0, %c0_0] : memref<16x16xbf16, #tpu.memory_space<vmem>>, vector<16x16xbf16>
    %c0_1 = arith.constant 0 : index
    %c0_2 = arith.constant 0 : index
    %1 = vector.load %arg2[%c0_1, %c0_2] : memref<16x128xbf16, #tpu.memory_space<vmem>>, vector<16x128xbf16>
    %cst = arith.constant dense<0.000000e+00> : vector<16x128xf32>
    %2 = tpu.matmul %0, %1, %cst {dimension_numbers = #tpu.dot_dimension_numbers<[1], [0], [0], [1], [0, 0, 1, 1], [], []>} : vector<16x16xbf16>, vector<16x128xbf16>, vector<16x128xf32> -> vector<16x128xf32>
    %c0_3 = arith.constant 0 : index
    %c0_4 = arith.constant 0 : index
    %3 = vector.load %arg3[%c0_3, %c0_4] : memref<1x128xf32, #tpu.memory_space<vmem>>, vector<1x128xf32>
    %4 = vector.broadcast %3 : vector<1x128xf32> to vector<16x128xf32>
    %5 = arith.addf %2, %4 : vector<16x128xf32>
    %cst_5 = arith.constant 0.000000e+00 : f32
    %6 = vector.broadcast %cst_5 : f32 to vector<16x128xf32>
    %7 = arith.maximumf %5, %6 : vector<16x128xf32>
    %8 = arith.truncf %7 : vector<16x128xf32> to vector<16x128xbf16>
    %c0_6 = arith.constant 0 : index
    %c0_7 = arith.constant 0 : index
    %9 = vector.load %arg8[%c0_6, %c0_7] : memref<16x128xbf16, #tpu.memory_space<vmem>>, vector<16x128xbf16>
    tpu.vector_store %arg8[%c0_6, %c0_7], %8 {strides = array<i32>} : memref<16x128xbf16, #tpu.memory_space<vmem>>, vector<16x128xbf16>,
    %c0_8 = arith.constant 0 : index
    %c0_9 = arith.constant 0 : index
    %10 = vector.load %arg4[%c0_8, %c0_9] : memref<128x128xbf16, #tpu.memory_space<vmem>>, vector<128x128xbf16>
    %cst_10 = arith.constant dense<0.000000e+00> : vector<16x128xf32>
    %11 = tpu.matmul %8, %10, %cst_10 {dimension_numbers = #tpu.dot_dimension_numbers<[1], [0], [0], [1], [0, 0, 1, 1], [], []>} : vector<16x128xbf16>, vector<128x128xbf16>, vector<16x128xf32> -> vector<16x128xf32>
    %c0_11 = arith.constant 0 : index
    %c0_12 = arith.constant 0 : index
    %12 = vector.load %arg5[%c0_11, %c0_12] : memref<1x128xf32, #tpu.memory_space<vmem>>, vector<1x128xf32>
    %13 = vector.broadcast %12 : vector<1x128xf32> to vector<16x128xf32>
    %14 = arith.addf %11, %13 : vector<16x128xf32>
    %cst_13 = arith.constant 0.000000e+00 : f32
    %15 = vector.broadcast %cst_13 : f32 to vector<16x128xf32>
    %16 = arith.maximumf %14, %15 : vector<16x128xf32>
    %17 = arith.truncf %16 : vector<16x128xf32> to vector<16x128xbf16>
    %c0_14 = arith.constant 0 : index
    %c0_15 = arith.constant 0 : index
    %18 = vector.load %arg6[%c0_14, %c0_15] : memref<128x128xbf16, #tpu.memory_space<vmem>>, vector<128x128xbf16>
    %cst_16 = arith.constant dense<0.000000e+00> : vector<16x128xf32>
    %19 = tpu.matmul %17, %18, %cst_16 {dimension_numbers = #tpu.dot_dimension_numbers<[1], [0], [0], [1], [0, 0, 1, 1], [], []>} : vector<16x128xbf16>, vector<128x128xbf16>, vector<16x128xf32> -> vector<16x128xf32>
    %c0_17 = arith.constant 0 : index
    %c0_18 = arith.constant 0 : index
    %20 = vector.load %arg7[%c0_17, %c0_18] : memref<1x128xf32, #tpu.memory_space<vmem>>, vector<1x128xf32>
    %21 = vector.broadcast %20 : vector<1x128xf32> to vector<16x128xf32>
    %22 = arith.addf %19, %21 : vector<16x128xf32>
    %23 = vector.extract_strided_slice %22 {offsets = [0, 0], sizes = [16, 4], strides = [1, 1]} : vector<16x128xf32> to vector<16x4xf32>
    %24 = arith.truncf %23 : vector<16x4xf32> to vector<16x4xbf16>
    %c0_19 = arith.constant 0 : index
    %c0_20 = arith.constant 0 : index
    %25 = vector.load %arg9[%c0_19, %c0_20] : memref<16x4xbf16, #tpu.memory_space<vmem>>, vector<16x4xbf16>
    tpu.vector_store %arg9[%c0_19, %c0_20], %24 {strides = array<i32>} : memref<16x4xbf16, #tpu.memory_space<vmem>>, vector<16x4xbf16>,
    return
  }
  func.func @transform_0(%arg0: i32) -> (i32, i32) {
    %c0_i32 = arith.constant 0 : i32
    %c0_i32_0 = arith.constant 0 : i32
    return %arg0, %c0_i32 : i32, i32
  }
  func.func @transform_1(%arg0: i32) -> (i32, i32) {
    %c0_i32 = arith.constant 0 : i32
    %c0_i32_0 = arith.constant 0 : i32
    %c0_i32_1 = arith.constant 0 : i32
    return %c0_i32, %c0_i32_0 : i32, i32
  }
  func.func @transform_2(%arg0: i32) -> (i32, i32) {
    %c0_i32 = arith.constant 0 : i32
    %c0_i32_0 = arith.constant 0 : i32
    %c0_i32_1 = arith.constant 0 : i32
    return %c0_i32, %c0_i32_0 : i32, i32
  }
  func.func @transform_3(%arg0: i32) -> (i32, i32) {
    %c0_i32 = arith.constant 0 : i32
    %c0_i32_0 = arith.constant 0 : i32
    %c0_i32_1 = arith.constant 0 : i32
    return %c0_i32, %c0_i32_0 : i32, i32
  }
  func.func @transform_4(%arg0: i32) -> (i32, i32) {
    %c0_i32 = arith.constant 0 : i32
    %c0_i32_0 = arith.constant 0 : i32
    %c0_i32_1 = arith.constant 0 : i32
    return %c0_i32, %c0_i32_0 : i32, i32
  }
  func.func @transform_5(%arg0: i32) -> (i32, i32) {
    %c0_i32 = arith.constant 0 : i32
    %c0_i32_0 = arith.constant 0 : i32
    %c0_i32_1 = arith.constant 0 : i32
    return %c0_i32, %c0_i32_0 : i32, i32
  }
  func.func @transform_6(%arg0: i32) -> (i32, i32) {
    %c0_i32 = arith.constant 0 : i32
    %c0_i32_0 = arith.constant 0 : i32
    %c0_i32_1 = arith.constant 0 : i32
    return %c0_i32, %c0_i32_0 : i32, i32
  }
  func.func @transform_7(%arg0: i32) -> (i32, i32) {
    %c0_i32 = arith.constant 0 : i32
    %c0_i32_0 = arith.constant 0 : i32
    return %arg0, %c0_i32 : i32, i32
  }
  func.func @transform_8(%arg0: i32) -> (i32, i32) {
    %c0_i32 = arith.constant 0 : i32
    %c0_i32_0 = arith.constant 0 : i32
    return %arg0, %c0_i32 : i32, i32
  }
}

</mosaic_0001>

<llo_original>
// kernel: mfpnet1_forward_flat.1
$region0: #{mfpnet1_forward_flat.1}
  #allocation0 [shape = 'u32[]', space=smem, size = 0x4, offset = 0x4, fixed_abs, tag = 'smem constant byte address 0x4 - core index']
  #allocation1 [shape = 'u32[144,128]{1,0:T(1,128)}', space=vmem, size = 0x12000, scoped, tag = 'internal scratch']
  %s0 = inlined_call_operand.vmem [shape: bf16[16,16], index: 0, kind: input, shape index: {}]
  %s1 = inlined_call_operand.hbm [shape: bf16[16,128], index: 1, kind: input, shape index: {}]
  %s2 = inlined_call_operand.vmem [shape: f32[1,128], index: 2, kind: input, shape index: {}]
  %s3 = inlined_call_operand.vmem [shape: bf16[128,128], index: 3, kind: input, shape index: {}]
  %s4 = inlined_call_operand.vmem [shape: f32[1,128], index: 4, kind: input, shape index: {}]
  %s5 = inlined_call_operand.vmem [shape: bf16[128,128], index: 5, kind: input, shape index: {}]
  %s6 = inlined_call_operand.vmem [shape: f32[1,128], index: 6, kind: input, shape index: {}]
  %s7 = inlined_call_operand.hbm [shape: bf16[16,128], index: 7, kind: output, shape index: {0}]
  %s8 = inlined_call_operand.vmem [shape: bf16[16,4], index: 8, kind: output, shape index: {1}]
  %9 = xla_tuple %s7, %s8
  %s10 = sld [smem:[#allocation0]]
  $region50: #{mfpnet1_forward_flat.1} parent=0
    _
  %s12 = ssub.s32 1, %s10
  %s13 = scalar_select 0, %s12, %s10
  $region1: #{mfpnet1_forward_flat.1} parent=0
    #allocation2 [shape = 'u8[4096]{0}', space=vmem, size = 0x1000, scoped, tag = 'input window, operand 1, single buffered']
    #allocation3 [shape = 's32[1]{0}', space=sflag, size = 0x4, scoped, tag = 'scoped memory for mfpnet1_forward_flat.1']
    #allocation4 [shape = 's32[1]{0}', space=sflag, size = 0x4, scoped, tag = 'scoped memory for mfpnet1_forward_flat.1']
    #allocation5 [shape = 'u8[4096]{0}', space=vmem, size = 0x1000, scoped, tag = 'output window, operand 0, single buffered']
    %14 = vsyncpa [#allocation3], 0
    %15 = vsyncpa [#allocation4], 0
    // Predicated region
    $region2: #{mfpnet1_forward_flat.1} parent=1 // pred_check
      _
    $region3: #{mfpnet1_forward_flat.1} parent=1 // pred_check_branch
      %17 = sbr.rel (0) target = $region5
    $region4: #{mfpnet1_forward_flat.1} parent=1 // pred_region
      _
    $region5: #{mfpnet1_forward_flat.1} parent=1 // pred_fallthru
      _
    // Predicated region
    $region6: #{mfpnet1_forward_flat.1} parent=1 // pred_check
      _
    $region7: #{mfpnet1_forward_flat.1} parent=1 // pred_check_branch
      %19 = sbr.rel (0) target = $region9
    $region8: #{mfpnet1_forward_flat.1} parent=1 // pred_region
      %s21 = ssub.s32 128, 128
      %22 = vsyncadd [#allocation3], %s21
      %s23 = sshll.u32 [#allocation2], 4
      %s24 = int_to_ptr.vmem [resolvable:$true] %s23
      %29 = dma.hbm_to_vmem [thread:$0]  %s1, 128, %s24, [#allocation3], 64, 64, 4
    $region9: #{mfpnet1_forward_flat.1} parent=1 // pred_fallthru
      _
    // Predicated region
    $region10: #{mfpnet1_forward_flat.1} parent=1 // pred_check
      _
    $region11: #{mfpnet1_forward_flat.1} parent=1 // pred_check_branch
      %31 = sbr.rel (0) target = $region13
    $region12: #{mfpnet1_forward_flat.1} parent=1 // pred_region
      _
    $region13: #{mfpnet1_forward_flat.1} parent=1 // pred_fallthru
      _
    // Predicated region
    $region14: #{mfpnet1_forward_flat.1} parent=1 // pred_check
      _
    $region15: #{mfpnet1_forward_flat.1} parent=1 // pred_check_branch
      %33 = sbr.rel (0) target = $region17
    $region16: #{mfpnet1_forward_flat.1} parent=1 // pred_region
      _
    $region17: #{mfpnet1_forward_flat.1} parent=1 // pred_fallthru
      _
    // Predicated region
    $region18: #{mfpnet1_forward_flat.1} parent=1 // pred_check
      _
    $region19: #{mfpnet1_forward_flat.1} parent=1 // pred_check_branch
      %35 = sbr.rel (0) target = $region21
    $region20: #{mfpnet1_forward_flat.1} parent=1 // pred_region
      _
    $region21: #{mfpnet1_forward_flat.1} parent=1 // pred_fallthru
      _
    // Predicated region
    $region22: #{mfpnet1_forward_flat.1} parent=1 // pred_check
      _
    $region23: #{mfpnet1_forward_flat.1} parent=1 // pred_check_branch
      %37 = sbr.rel (0) target = $region25
    $region24: #{mfpnet1_forward_flat.1} parent=1 // pred_region
      _
    $region25: #{mfpnet1_forward_flat.1} parent=1 // pred_fallthru
      _
    // Predicated region
    $region26: #{mfpnet1_forward_flat.1} parent=1 // pred_check
      _
    $region27: #{mfpnet1_forward_flat.1} parent=1 // pred_check_branch
      %39 = sbr.rel (0) target = $region29
    $region28: #{mfpnet1_forward_flat.1} parent=1 // pred_region
      _
    $region29: #{mfpnet1_forward_flat.1} parent=1 // pred_fallthru
      _
    // Predicated region
    $region30: #{mfpnet1_forward_flat.1} parent=1 // pred_check
      _
    $region31: #{mfpnet1_forward_flat.1} parent=1 // pred_check_branch
      %41 = sbr.rel (0) target = $region33
    $region32: #{mfpnet1_forward_flat.1} parent=1 // pred_region
      %42 = dma.done [#allocation3], 128
    $region33: #{mfpnet1_forward_flat.1} parent=1 // pred_fallthru
      _
    %v44 = vld [vmem:[%s0] sm:$0xf]
    %v45 = vld [vmem:[%s0 + $0x4] sm:$0xf]
    %v46 = vld [vmem:[#allocation2] sm:$0xf]
    %v47 = vld [vmem:[#allocation2 + $0x4] sm:$0xf]
    %v48 = vld [vmem:[%s2] sm:$0x1]
    %v50 = vlaneseq
    %v51 = vshrl.u32 %v50, 7
    %v52 = vsub.s32 0, %v51
    %v53 = vrot.slane %v48, %v52
    %v57 = vunpack.c.l.b16 %v44
    %v58 = vunpack.c.l.b16 %v45
    %v59 = vpack.c.b16 %v58, %v57
    %v62 = vunpack.c.l.b16 %v46
    %v63 = vunpack.c.l.b16 %v47
    %v64 = vpack.c.b16 %v63, %v62
    %vm66 = vcmask 130048
    %v68 = vsel %vm66, %v59, 0
    %70 = vmatprep.subr.bf16.mxu0 0
    %71 = vmatpush1.bf16.msra.mxu0 0
    %72 = vmatprep.subr.bf16.mxu0 0
    %73 = vmatpush1.bf16.msra.mxu0 0
    %74 = vmatprep.subr.bf16.mxu0 0
    %75 = vmatpush1.bf16.msra.mxu0 0
    %76 = vmatprep.subr.bf16.mxu0 0
    %77 = vmatpush1.bf16.msra.mxu0 0
    %78 = vmatprep.subr.bf16.mxu0 0
    %79 = vmatpush1.bf16.msra.mxu0 0
    %80 = vmatprep.subr.bf16.mxu0 0
    %81 = vmatpush1.bf16.msra.mxu0 0
    %82 = vmatprep.subr.bf16.mxu0 0
    %83 = vmatpush1.bf16.msra.mxu0 0
    %84 = vmatprep.subr.bf16.mxu0 0
    %85 = vmatpush1.bf16.msra.mxu0 %v64
    %86 = vmatprep.subr.bf16.mxu0 0
    %87 = vmatpush2.bf16.msra.mxu0 0
    %88 = vmatprep.subr.bf16.mxu0 0
    %89 = vmatpush2.bf16.msra.mxu0 0
    %90 = vmatprep.subr.bf16.mxu0 0
    %91 = vmatpush2.bf16.msra.mxu0 0
    %92 = vmatprep.subr.bf16.mxu0 0
    %93 = vmatpush2.bf16.msra.mxu0 0
    %94 = vmatprep.subr.bf16.mxu0 0
    %95 = vmatpush2.bf16.msra.mxu0 0
    %96 = vmatprep.subr.bf16.mxu0 0
    %97 = vmatpush2.bf16.msra.mxu0 0
    %98 = vmatprep.subr.bf16.mxu0 0
    %99 = vmatpush2.bf16.msra.mxu0 0
    %100 = vmatprep.subr.bf16.mxu0 0
    %101 = vmatpush2.bf16.msra.mxu0 0
    %102 = vmatprep.mubr.bf16.mxu0 0
    %103 = vmatmul.mubr.bf16.gmra.mxu0 %v68
    %v104 = vpop.f32.mrf.mxu0
    %v105 = vadd.f32 %v53, %v104
    %v106 = vpop.f32.mrf.mxu0
    %v107 = vpop.f32.mrf.mxu0
    %v108 = vadd.f32 %v53, %v107
    %v109 = vpop.f32.mrf.mxu0
    %110 = vdwg.mxu0
    %v111 = vmax.f32 %v105, 0.0
    %v112 = vmax.f32 %v108, 0.0
    %v113 = vpack.c.bf16 %v112, %v111
    %v115 = vunpack.c.l.b16 %v113
    %v116 = vunpack.c.h.b16 %v113
    %v117 = vpack.c.b16 %v115, %v115
    %v118 = vpack.c.b16 %v116, %v116
    %121 = vst [vmem:[#allocation5] sm:$0xf] %v117
    %122 = vst [vmem:[#allocation5 + $0x4] sm:$0xf] %v118
    %v123 = vld [vmem:[%s3] sm:$0xf]
    %v124 = vld [vmem:[%s3 + $0x4] sm:$0xf]
    %v125 = vld [vmem:[%s3 + $0x8] sm:$0xf]
    %v126 = vld [vmem:[%s3 + $0xc] sm:$0xf]
    %v127 = vld [vmem:[%s3 + $0x10] sm:$0xf]
    %v128 = vld [vmem:[%s3 + $0x14] sm:$0xf]
    %v129 = vld [vmem:[%s3 + $0x18] sm:$0xf]
    %v130 = vld [vmem:[%s3 + $0x1c] sm:$0xf]
    %v131 = vld [vmem:[%s3 + $0x20] sm:$0xf]
    %v132 = vld [vmem:[%s3 + $0x24] sm:$0xf]
    %v133 = vld [vmem:[%s3 + $0x28] sm:$0xf]
    %v134 = vld [vmem:[%s3 + $0x2c] sm:$0xf]
    %v135 = vld [vmem:[%s3 + $0x30] sm:$0xf]
    %v136 = vld [vmem:[%s3 + $0x34] sm:$0xf]
    %v137 = vld [vmem:[%s3 + $0x38] sm:$0xf]
    %v138 = vld [vmem:[%s3 + $0x3c] sm:$0xf]
    %v139 = vld [vmem:[%s4] sm:$0x1]
    %v141 = vlaneseq
    %v142 = vshrl.u32 %v141, 7
    %v143 = vsub.s32 0, %v142
    %v144 = vrot.slane %v139, %v143
    %v162 = vunpack.c.l.b16 %v123
    %v163 = vunpack.c.l.b16 %v124
    %v164 = vunpack.c.l.b16 %v125
    %v165 = vunpack.c.l.b16 %v126
    %v166 = vunpack.c.l.b16 %v127
    %v167 = vunpack.c.l.b16 %v128
    %v168 = vunpack.c.l.b16 %v129
    %v169 = vunpack.c.l.b16 %v130
    %v170 = vunpack.c.l.b16 %v131
    %v171 = vunpack.c.l.b16 %v132
    %v172 = vunpack.c.l.b16 %v133
    %v173 = vunpack.c.l.b16 %v134
    %v174 = vunpack.c.l.b16 %v135
    %v175 = vunpack.c.l.b16 %v136
    %v176 = vunpack.c.l.b16 %v137
    %v177 = vunpack.c.l.b16 %v138
    %v178 = vpack.c.b16 %v163, %v162
    %v179 = vpack.c.b16 %v165, %v164
    %v180 = vpack.c.b16 %v167, %v166
    %v181 = vpack.c.b16 %v169, %v168
    %v182 = vpack.c.b16 %v171, %v170
    %v183 = vpack.c.b16 %v173, %v172
    %v184 = vpack.c.b16 %v175, %v174
    %v185 = vpack.c.b16 %v177, %v176
    %194 = vmatprep.subr.bf16.mxu0 0
    %195 = vmatpush1.bf16.msra.mxu0 %v185
    %196 = vmatprep.subr.bf16.mxu0 0
    %197 = vmatpush1.bf16.msra.mxu0 %v184
    %198 = vmatprep.subr.bf16.mxu0 0
    %199 = vmatpush1.bf16.msra.mxu0 %v183
    %200 = vmatprep.subr.bf16.mxu0 0
    %201 = vmatpush1.bf16.msra.mxu0 %v182
    %202 = vmatprep.subr.bf16.mxu0 0
    %203 = vmatpush1.bf16.msra.mxu0 %v181
    %204 = vmatprep.subr.bf16.mxu0 0
    %205 = vmatpush1.bf16.msra.mxu0 %v180
    %206 = vmatprep.subr.bf16.mxu0 0
    %207 = vmatpush1.bf16.msra.mxu0 %v179
    %208 = vmatprep.subr.bf16.mxu0 0
    %209 = vmatpush1.bf16.msra.mxu0 %v178
    %210 = vmatprep.subr.bf16.mxu0 0
    %211 = vmatpush2.bf16.msra.mxu0 0
    %212 = vmatprep.subr.bf16.mxu0 0
    %213 = vmatpush2.bf16.msra.mxu0 0
    %214 = vmatprep.subr.bf16.mxu0 0
    %215 = vmatpush2.bf16.msra.mxu0 0
    %216 = vmatprep.subr.bf16.mxu0 0
    %217 = vmatpush2.bf16.msra.mxu0 0
    %218 = vmatprep.subr.bf16.mxu0 0
    %219 = vmatpush2.bf16.msra.mxu0 0
    %220 = vmatprep.subr.bf16.mxu0 0
    %221 = vmatpush2.bf16.msra.mxu0 0
    %222 = vmatprep.subr.bf16.mxu0 0
    %223 = vmatpush2.bf16.msra.mxu0 0
    %224 = vmatprep.subr.bf16.mxu0 0
    %225 = vmatpush2.bf16.msra.mxu0 0
    %226 = vmatprep.mubr.bf16.mxu0 0
    %227 = vmatmul.mubr.bf16.gmra.mxu0 %v113
    %v228 = vpop.f32.mrf.mxu0
    %v229 = vadd.f32 %v144, %v228
    %v230 = vpop.f32.mrf.mxu0
    %v231 = vpop.f32.mrf.mxu0
    %v232 = vadd.f32 %v144, %v231
    %v233 = vpop.f32.mrf.mxu0
    %234 = vdwg.mxu0
    %v235 = vmax.f32 %v229, 0.0
    %v236 = vmax.f32 %v232, 0.0
    %v237 = vpack.c.bf16 %v236, %v235
    %v238 = vld [vmem:[%s5] sm:$0xf]
    %v239 = vld [vmem:[%s5 + $0x4] sm:$0xf]
    %v240 = vld [vmem:[%s5 + $0x8] sm:$0xf]
    %v241 = vld [vmem:[%s5 + $0xc] sm:$0xf]
    %v242 = vld [vmem:[%s5 + $0x10] sm:$0xf]
    %v243 = vld [vmem:[%s5 + $0x14] sm:$0xf]
    %v244 = vld [vmem:[%s5 + $0x18] sm:$0xf]
    %v245 = vld [vmem:[%s5 + $0x1c] sm:$0xf]
    %v246 = vld [vmem:[%s5 + $0x20] sm:$0xf]
    %v247 = vld [vmem:[%s5 + $0x24] sm:$0xf]
    %v248 = vld [vmem:[%s5 + $0x28] sm:$0xf]
    %v249 = vld [vmem:[%s5 + $0x2c] sm:$0xf]
    %v250 = vld [vmem:[%s5 + $0x30] sm:$0xf]
    %v251 = vld [vmem:[%s5 + $0x34] sm:$0xf]
    %v252 = vld [vmem:[%s5 + $0x38] sm:$0xf]
    %v253 = vld [vmem:[%s5 + $0x3c] sm:$0xf]
    %v254 = vld [vmem:[%s6] sm:$0x1]
    %v256 = vlaneseq
    %v257 = vshrl.u32 %v256, 7
    %v258 = vsub.s32 0, %v257
    %v259 = vrot.slane %v254, %v258
    %v277 = vunpack.c.l.b16 %v238
    %v278 = vunpack.c.l.b16 %v239
    %v279 = vunpack.c.l.b16 %v240
    %v280 = vunpack.c.l.b16 %v241
    %v281 = vunpack.c.l.b16 %v242
    %v282 = vunpack.c.l.b16 %v243
    %v283 = vunpack.c.l.b16 %v244
    %v284 = vunpack.c.l.b16 %v245
    %v285 = vunpack.c.l.b16 %v246
    %v286 = vunpack.c.l.b16 %v247
    %v287 = vunpack.c.l.b16 %v248
    %v288 = vunpack.c.l.b16 %v249
    %v289 = vunpack.c.l.b16 %v250
    %v290 = vunpack.c.l.b16 %v251
    %v291 = vunpack.c.l.b16 %v252
    %v292 = vunpack.c.l.b16 %v253
    %v293 = vpack.c.b16 %v278, %v277
    %v294 = vpack.c.b16 %v280, %v279
    %v295 = vpack.c.b16 %v282, %v281
    %v296 = vpack.c.b16 %v284, %v283
    %v297 = vpack.c.b16 %v286, %v285
    %v298 = vpack.c.b16 %v288, %v287
    %v299 = vpack.c.b16 %v290, %v289
    %v300 = vpack.c.b16 %v292, %v291
    %309 = vmatprep.subr.bf16.mxu0 0
    %310 = vmatpush1.bf16.msra.mxu0 %v300
    %311 = vmatprep.subr.bf16.mxu0 0
    %312 = vmatpush1.bf16.msra.mxu0 %v299
    %313 = vmatprep.subr.bf16.mxu0 0
    %314 = vmatpush1.bf16.msra.mxu0 %v298
    %315 = vmatprep.subr.bf16.mxu0 0
    %316 = vmatpush1.bf16.msra.mxu0 %v297
    %317 = vmatprep.subr.bf16.mxu0 0
    %318 = vmatpush1.bf16.msra.mxu0 %v296
    %319 = vmatprep.subr.bf16.mxu0 0
    %320 = vmatpush1.bf16.msra.mxu0 %v295
    %321 = vmatprep.subr.bf16.mxu0 0
    %322 = vmatpush1.bf16.msra.mxu0 %v294
    %323 = vmatprep.subr.bf16.mxu0 0
    %324 = vmatpush1.bf16.msra.mxu0 %v293
    %325 = vmatprep.subr.bf16.mxu0 0
    %326 = vmatpush2.bf16.msra.mxu0 0
    %327 = vmatprep.subr.bf16.mxu0 0
    %328 = vmatpush2.bf16.msra.mxu0 0
    %329 = vmatprep.subr.bf16.mxu0 0
    %330 = vmatpush2.bf16.msra.mxu0 0
    %331 = vmatprep.subr.bf16.mxu0 0
    %332 = vmatpush2.bf16.msra.mxu0 0
    %333 = vmatprep.subr.bf16.mxu0 0
    %334 = vmatpush2.bf16.msra.mxu0 0
    %335 = vmatprep.subr.bf16.mxu0 0
    %336 = vmatpush2.bf16.msra.mxu0 0
    %337 = vmatprep.subr.bf16.mxu0 0
    %338 = vmatpush2.bf16.msra.mxu0 0
    %339 = vmatprep.subr.bf16.mxu0 0
    %340 = vmatpush2.bf16.msra.mxu0 0
    %341 = vmatprep.mubr.bf16.mxu0 0
    %342 = vmatmul.mubr.bf16.gmra.mxu0 %v237
    %v343 = vpop.f32.mrf.mxu0
    %v344 = vadd.f32 %v259, %v343
    %v345 = vpop.f32.mrf.mxu0
    %v346 = vpop.f32.mrf.mxu0
    %v347 = vadd.f32 %v259, %v346
    %v348 = vpop.f32.mrf.mxu0
    %349 = vdwg.mxu0
    %v350 = vpack.c.bf16 %v347, %v344
    %v352 = vunpack.c.l.b16 %v350
    %v353 = vunpack.c.h.b16 %v350
    %v354 = vpack.c.b16 %v352, %v352
    %v355 = vpack.c.b16 %v353, %v353
    %vm358 = vcmask 27648
    %359 = vst.msk [vmem:[%s8] sm:$0xf] %vm358, %v354
    %360 = vst.msk [vmem:[%s8 + $0x4] sm:$0xf] %vm358, %v355
    // Predicated region
    $region34: #{mfpnet1_forward_flat.1} parent=1 // pred_check
      _
    $region35: #{mfpnet1_forward_flat.1} parent=1 // pred_check_branch
      %362 = sbr.rel (0) target = $region37
    $region36: #{mfpnet1_forward_flat.1} parent=1 // pred_region
      %s364 = ssub.s32 128, 128
      %365 = vsyncadd [#allocation4], %s364
      %s366 = sshll.u32 [#allocation5], 4
      %s367 = int_to_ptr.vmem [resolvable:$true] %s366
      %372 = dma.vmem_to_hbm [thread:$0]  %s367, 128, %s7, [#allocation4], 64, 64, 4
    $region37: #{mfpnet1_forward_flat.1} parent=1 // pred_fallthru
      _
    // Predicated region
    $region38: #{mfpnet1_forward_flat.1} parent=1 // pred_check
      _
    $region39: #{mfpnet1_forward_flat.1} parent=1 // pred_check_branch
      %374 = sbr.rel (0) target = $region41
    $region40: #{mfpnet1_forward_flat.1} parent=1 // pred_region
      _
    $region41: #{mfpnet1_forward_flat.1} parent=1 // pred_fallthru
      _
    // Predicated region
    $region42: #{mfpnet1_forward_flat.1} parent=1 // pred_check
      _
    $region43: #{mfpnet1_forward_flat.1} parent=1 // pred_check_branch
      %376 = sbr.rel (0) target = $region45
    $region44: #{mfpnet1_forward_flat.1} parent=1 // pred_region
      %377 = dma.done [#allocation4], 128
    $region45: #{mfpnet1_forward_flat.1} parent=1 // pred_fallthru
      _
    // Predicated region
    $region46: #{mfpnet1_forward_flat.1} parent=1 // pred_check
      _
    $region47: #{mfpnet1_forward_flat.1} parent=1 // pred_check_branch
      %379 = sbr.rel (0) target = $region49
    $region48: #{mfpnet1_forward_flat.1} parent=1 // pred_region
      _
    $region49: #{mfpnet1_forward_flat.1} parent=1 // pred_fallthru
      _
    %380 = vsyncpa [#allocation3], 1
    %381 = vsyncpa [#allocation4], 1

</llo_original>
